<compile_context>
chip_gen: v7x
topology: tpu7x:2x2x1
jax: 0.10.0
libtpu: 0.0.40
codegen_flags: <defaults>
</compile_context>

<pallas_src>
import functools

import jax
import jax.numpy as jnp
from jax.experimental import pallas as pl
from jax.experimental.pallas import tpu as pltpu


def _group_norm_kernel(x_ref, g_ref, fgc_ref, fcg_ref, o_ref, *, inv_n):
    """x_ref: (1, Ct, S); g_ref: (Ct, 1) holding (1 + gain);
    fgc_ref: (Gt, Ct) group<-channel fold; fcg_ref: (Ct, Gt) channel<-group fold;
    o_ref: (1, Ct, S)."""
    x = x_ref[0].astype(jnp.float32)                       # (Ct, S)

    # Per-channel partial sums (lane reductions -> XLU, one pass over x / x*x).
    s1 = jnp.sum(x, axis=1, keepdims=True)                 # (Ct, 1)
    s2 = jnp.sum(x * x, axis=1, keepdims=True)             # (Ct, 1)
    s12 = jnp.concatenate([s1, s2], axis=1)                # (Ct, 2)

    # ONE tiny MXU fold: per-group [sum, sum_sq].  The fold matrices are
    # constant inputs (hoisted to the wrapper), so no per-step VPU work here.
    gs = jnp.dot(fgc_ref[...], s12, preferred_element_type=jnp.float32)  # (Gt, 2)
    mean = gs[:, 0:1] * inv_n
    var = jnp.maximum(gs[:, 1:2] * inv_n - mean * mean, 0.0)   # unbiased=False
    inv_std = jax.lax.rsqrt(var + 1e-6)                    # (Gt, 1), EUP

    # Expand inv_std back to channels and fold in (1 + gain): one fused
    # per-channel scale, so the elementwise phase is a single full-tile multiply.
    scale = jnp.dot(fcg_ref[...], inv_std,
                    preferred_element_type=jnp.float32) * g_ref[...]     # (Ct, 1)

    # Single full-tile multiply + store.  NOTE: no mean subtraction, per module.
    o_ref[0] = (x * scale).astype(o_ref.dtype)


def _device_vmem_bytes(default=64 << 20):
    """Physical VMEM capacity; conservative (v7x-sized) fallback."""
    try:
        info = pltpu.get_tpu_info()
        v = getattr(info, "vmem_capacity_bytes", None)
        if v:
            return int(v)
    except Exception:
        pass
    return default


def _pick_channel_block(c, cg, s, itemsize, budget_bytes, batch, min_steps=8):
    """Largest channel block of whole groups that (a) satisfies the (8,128)
    BlockSpec rule on the second-minor dim, (b) keeps double-buffered in+out
    blocks plus the in-kernel f32 working copy under budget_bytes, and
    (c) prefers leaving >= min_steps grid steps for pipelining / the two v7x
    TensorCores before maximizing block size."""
    groups = c // cg
    legal = []
    for gpb in range(1, groups + 1):
        if groups % gpb:
            continue
        ct = gpb * cg
        if ct == c or ct % 8 == 0:
            legal.append(ct)

    def footprint(ct):
        # 2 x (in + out) double-buffered blocks + f32 working copy + slack.
        return 4 * ct * s * itemsize + ct * s * 4 + (2 << 20)

    fits = [ct for ct in legal if footprint(ct) <= budget_bytes]
    if not fits:
        # TODO(synk): add a spatial-split two-phase reduction path for shapes
        # where even a single group's tile exceeds the VMEM budget.
        return min(legal)
    good = [ct for ct in fits if batch * (c // ct) >= min_steps]
    return max(good) if good else max(fits)


def group_norm(x, gain, groups, *, donate_input=False):
    """x: (B, C, H, W); gain: (C,). Returns same shape/dtype as x."""
    b, c, h, w = x.shape
    assert c % groups == 0, "channels must be divisible by groups"
    cg = c // groups
    s = h * w

    # Contiguous trailing-dim reshape: a bitcast, no HBM traffic (no pad/slice).
    x_r = x.reshape(b, c, s)

    itemsize = jnp.dtype(x.dtype).itemsize
    budget = max(16 << 20, min(int(_device_vmem_bytes() * 0.75), 96 << 20))
    ct = _pick_channel_block(c, cg, s, itemsize, budget, batch=b)
    gt = ct // cg

    # Hoisted constants: (1 + gain) in f32 and the 0/1 fold matrices for one
    # channel block (identical for every block since blocks hold whole groups).
    gain_p1 = (1.0 + gain.astype(jnp.float32)).reshape(c, 1)
    ch = jnp.arange(ct, dtype=jnp.int32)
    gr = jnp.arange(gt, dtype=jnp.int32)
    fold_gc = (ch[None, :] // cg == gr[:, None]).astype(jnp.float32)   # (Gt, Ct)
    fold_cg = fold_gc.T                                                # (Ct, Gt)

    block_bytes = ct * s * itemsize
    need = 4 * block_bytes + ct * s * 4 + (2 << 20)   # dbl-buf in+out, f32 temp, slack
    vmem_limit = int(min(budget, max(need, 16 << 20)))

    kernel = functools.partial(_group_norm_kernel, inv_n=float(1.0 / (cg * s)))

    out = pl.pallas_call(
        kernel,
        out_shape=jax.ShapeDtypeStruct((b, c, s), x.dtype),
        grid=(b, c // ct),
        in_specs=[
            pl.BlockSpec((1, ct, s), lambda i, j: (i, j, 0)),   # x block
            pl.BlockSpec((ct, 1), lambda i, j: (j, 0)),         # (1 + gain)
            pl.BlockSpec((gt, ct), lambda i, j: (0, 0)),        # fold group<-chan
            pl.BlockSpec((ct, gt), lambda i, j: (0, 0)),        # fold chan<-group
        ],
        out_specs=pl.BlockSpec((1, ct, s), lambda i, j: (i, j, 0)),
        compiler_params=pltpu.CompilerParams(
            dimension_semantics=("parallel", "parallel"),
            vmem_limit_bytes=vmem_limit,
        ),
        input_output_aliases={0: 0} if donate_input else {},
    )(x_r, gain_p1, fold_gc, fold_cg)

    return out.reshape(b, c, h, w)


def group_norm_ref(x, gain, groups):
    """Pure-JAX reference mirroring the PyTorch forward (two-pass variance)."""
    b, c, h, w = x.shape
    xr = x.reshape(b, groups, c // groups, h, w).astype(jnp.float32)
    var = jnp.var(xr, axis=(2, 3, 4), keepdims=True)       # unbiased=False
    std = jnp.sqrt(var + 1e-6)
    y = (xr / std).reshape(b, c, h, w)
    return (y * (1.0 + gain[None, :, None, None])).astype(x.dtype)


if __name__ == "__main__":
    key = jax.random.PRNGKey(0)
    k_x, k_g, k_x2 = jax.random.split(key, 3)

    B, C, H, W = 2, 64, 16, 16
    GROUPS = 32                     # module default

    x = jax.random.normal(k_x, (B, C, H, W), dtype=jnp.float32)
    # deterministic param init mirroring nn.Parameter(torch.randn(dim) * 0.02)
    gain = jax.random.normal(k_g, (C,), dtype=jnp.float32) * 0.02

    out = jax.block_until_ready(group_norm(x, gain, GROUPS))
    ref = group_norm_ref(x, gain, GROUPS)
    assert out.shape == (B, C, H, W)
    assert jnp.allclose(out, ref, atol=1e-5, rtol=1e-5), "mismatch vs reference"

    # Spatial size that is NOT a multiple of 128 exercises the masked
    # lane-tail store path (no HBM pad/slice round-trip anymore).
    x2 = jax.random.normal(k_x2, (B, C, 10, 10), dtype=jnp.float32)
    out2 = jax.block_until_ready(group_norm(x2, gain, GROUPS))
    ref2 = group_norm_ref(x2, gain, GROUPS)
    assert jnp.allclose(out2, ref2, atol=1e-5, rtol=1e-5), "mismatch (masked tail)"

    print("KERNEL_OK")
</pallas_src>

<mosaic_0001>
module attributes {stable_mosaic.version = 11 : i64} {
  func.func @_group_norm_kernel(%arg0: i32, %arg1: i32, %arg2: memref<1x16x256xf32, #tpu.memory_space<vmem>>, %arg3: memref<16x1xf32, #tpu.memory_space<vmem>>, %arg4: memref<8x16xf32, #tpu.memory_space<vmem>>, %arg5: memref<16x8xf32, #tpu.memory_space<vmem>>, %arg6: memref<1x16x256xf32, #tpu.memory_space<vmem>>) attributes {dimension_semantics = [#tpu.dimension_semantics<parallel>, #tpu.dimension_semantics<parallel>], iteration_bounds = array<i64: 2, 4>, scalar_prefetch = 0 : i64, scratch_operands = 0 : i64, tpu.core_type = #tpu.core_type<tc>, window_params = [{transform_indices = @transform_0, window_bounds = array<i64: 1, 16, 256>}, {transform_indices = @transform_1, window_bounds = array<i64: 16, 1>}, {pipeline_mode = #tpu.pipeline_mode<synchronous>, transform_indices = @transform_2, window_bounds = array<i64: 8, 16>}, {pipeline_mode = #tpu.pipeline_mode<synchronous>, transform_indices = @transform_3, window_bounds = array<i64: 16, 8>}, {transform_indices = @transform_4, window_bounds = array<i64: 1, 16, 256>}]} {
    %c0 = arith.constant 0 : index
    %c0_0 = arith.constant 0 : index
    %c0_1 = arith.constant 0 : index
    %0 = vector.load %arg2[%c0, %c0_0, %c0_1] : memref<1x16x256xf32, #tpu.memory_space<vmem>>, vector<1x16x256xf32>
    %1 = vector.shape_cast %0 : vector<1x16x256xf32> to vector<16x256xf32>
    %cst = arith.constant dense<0.000000e+00> : vector<16xf32>
    %2 = vector.multi_reduction <add>, %1, %cst [1] : vector<16x256xf32> to vector<16xf32>
    %3 = vector.shape_cast %2 : vector<16xf32> to vector<16x1xf32>
    %4 = arith.mulf %1, %1 : vector<16x256xf32>
    %cst_2 = arith.constant dense<0.000000e+00> : vector<16xf32>
    %5 = vector.multi_reduction <add>, %4, %cst_2 [1] : vector<16x256xf32> to vector<16xf32>
    %6 = vector.shape_cast %5 : vector<16xf32> to vector<16x1xf32>
    %7 = tpu.concatenate %3, %6 in 1 : vector<16x1xf32>, vector<16x1xf32> -> vector<16x2xf32>
    %c0_3 = arith.constant 0 : index
    %c0_4 = arith.constant 0 : index
    %8 = vector.load %arg4[%c0_3, %c0_4] : memref<8x16xf32, #tpu.memory_space<vmem>>, vector<8x16xf32>
    %cst_5 = arith.constant dense<0.000000e+00> : vector<8x2xf32>
    %9 = tpu.matmul %8, %7, %cst_5 {dimension_numbers = #tpu.dot_dimension_numbers<[1], [0], [0], [1], [0, 0, 1, 1], [], []>} : vector<8x16xf32>, vector<16x2xf32>, vector<8x2xf32> -> vector<8x2xf32>
    %10 = vector.extract_strided_slice %9 {offsets = [0, 0], sizes = [8, 1], strides = [1, 1]} : vector<8x2xf32> to vector<8x1xf32>
    %cst_6 = arith.constant 0.001953125 : f32
    %11 = vector.broadcast %cst_6 : f32 to vector<8x1xf32>
    %12 = arith.mulf %10, %11 : vector<8x1xf32>
    %13 = vector.extract_strided_slice %9 {offsets = [0, 1], sizes = [8, 1], strides = [1, 1]} : vector<8x2xf32> to vector<8x1xf32>
    %cst_7 = arith.constant 0.001953125 : f32
    %14 = vector.broadcast %cst_7 : f32 to vector<8x1xf32>
    %15 = arith.mulf %13, %14 : vector<8x1xf32>
    %16 = arith.mulf %12, %12 : vector<8x1xf32>
    %17 = arith.subf %15, %16 : vector<8x1xf32>
    %cst_8 = arith.constant 0.000000e+00 : f32
    %18 = vector.broadcast %cst_8 : f32 to vector<8x1xf32>
    %19 = arith.maximumf %17, %18 : vector<8x1xf32>
    %cst_9 = arith.constant 9.99999997E-7 : f32
    %20 = vector.broadcast %cst_9 : f32 to vector<8x1xf32>
    %21 = arith.addf %19, %20 : vector<8x1xf32>
    %22 = math.rsqrt %21 : vector<8x1xf32>
    %c0_10 = arith.constant 0 : index
    %c0_11 = arith.constant 0 : index
    %23 = vector.load %arg5[%c0_10, %c0_11] : memref<16x8xf32, #tpu.memory_space<vmem>>, vector<16x8xf32>
    %cst_12 = arith.constant dense<0.000000e+00> : vector<16x1xf32>
    %24 = tpu.matmul %23, %22, %cst_12 {dimension_numbers = #tpu.dot_dimension_numbers<[1], [0], [0], [1], [0, 0, 1, 1], [], []>} : vector<16x8xf32>, vector<8x1xf32>, vector<16x1xf32> -> vector<16x1xf32>
    %c0_13 = arith.constant 0 : index
    %c0_14 = arith.constant 0 : index
    %25 = vector.load %arg3[%c0_13, %c0_14] : memref<16x1xf32, #tpu.memory_space<vmem>>, vector<16x1xf32>
    %26 = arith.mulf %24, %25 : vector<16x1xf32>
    %27 = vector.broadcast %26 : vector<16x1xf32> to vector<16x256xf32>
    %28 = arith.mulf %1, %27 : vector<16x256xf32>
    %c0_15 = arith.constant 0 : index
    %c0_16 = arith.constant 0 : index
    %c0_17 = arith.constant 0 : index
    %29 = vector.load %arg6[%c0_15, %c0_16, %c0_17] : memref<1x16x256xf32, #tpu.memory_space<vmem>>, vector<1x16x256xf32>
    %30 = vector.shape_cast %29 : vector<1x16x256xf32> to vector<16x256xf32>
    %31 = vector.shape_cast %28 : vector<16x256xf32> to vector<1x16x256xf32>
    tpu.vector_store %arg6[%c0_15, %c0_16, %c0_17], %31 {strides = array<i32>} : memref<1x16x256xf32, #tpu.memory_space<vmem>>, vector<1x16x256xf32>,
    return
  }
  func.func @transform_0(%arg0: i32, %arg1: i32) -> (i32, i32, i32) {
    %c0_i32 = arith.constant 0 : i32
    %c0_i32_0 = arith.constant 0 : i32
    return %arg0, %arg1, %c0_i32 : i32, i32, i32
  }
  func.func @transform_1(%arg0: i32, %arg1: i32) -> (i32, i32) {
    %c0_i32 = arith.constant 0 : i32
    %c0_i32_0 = arith.constant 0 : i32
    return %arg1, %c0_i32 : i32, i32
  }
  func.func @transform_2(%arg0: i32, %arg1: i32) -> (i32, i32) {
    %c0_i32 = arith.constant 0 : i32
    %c0_i32_0 = arith.constant 0 : i32
    %c0_i32_1 = arith.constant 0 : i32
    return %c0_i32, %c0_i32_0 : i32, i32
  }
  func.func @transform_3(%arg0: i32, %arg1: i32) -> (i32, i32) {
    %c0_i32 = arith.constant 0 : i32
    %c0_i32_0 = arith.constant 0 : i32
    %c0_i32_1 = arith.constant 0 : i32
    return %c0_i32, %c0_i32_0 : i32, i32
  }
  func.func @transform_4(%arg0: i32, %arg1: i32) -> (i32, i32, i32) {
    %c0_i32 = arith.constant 0 : i32
    %c0_i32_0 = arith.constant 0 : i32
    return %arg0, %arg1, %c0_i32 : i32, i32, i32
  }
}

</mosaic_0001>

<llo_original>
// kernel: tpu_custom_call.1
$region0: #{tpu_custom_call.1}
  #allocation0 [shape = 'u32[]', space=smem, size = 0x4, offset = 0x4, fixed_abs, tag = 'smem constant byte address 0x4 - core index']
  #allocation1 [shape = 'u32[144,128]{1,0:T(1,128)}', space=vmem, size = 0x12000, scoped, tag = 'internal scratch']
  %s0 = inlined_call_operand.hbm [shape: f32[2,64,256], index: 0, kind: input, shape index: {}]
  %s1 = inlined_call_operand.vmem [shape: f32[64,1], index: 1, kind: input, shape index: {}]
  %s2 = inlined_call_operand.vmem [shape: f32[8,16], index: 2, kind: input, shape index: {}]
  %s3 = inlined_call_operand.vmem [shape: f32[16,8], index: 3, kind: input, shape index: {}]
  %s4 = inlined_call_operand.hbm [shape: f32[2,64,256], index: 4, kind: output, shape index: {}]
  %s5 = sld [smem:[#allocation0]]
  $region53: #{tpu_custom_call.1} parent=0
    _
  %s7 = ssub.s32 1, %s5
  %s8 = scalar_select 0, %s7, %s5
  $region1: #{tpu_custom_call.1} parent=0
    #allocation2 [shape = 'u8[32768]{0}', space=vmem, size = 0x8000, scoped, tag = 'input window, operand 0']
    #allocation3 [shape = 's32[2]{0}', space=sflag, size = 0x8, scoped, tag = 'scoped memory for tpu_custom_call.1']
    #allocation4 [shape = 's32[2]{0}', space=sflag, size = 0x8, scoped, tag = 'scoped memory for tpu_custom_call.1']
    #allocation5 [shape = 'u8[32768]{0}', space=vmem, size = 0x8000, scoped, tag = 'output window, operand 0']
    %9 = vsyncpa [#allocation3], 0
    %s10 = scalar_lea.sflag [#allocation3], 1
    %11 = vsyncpa %s10, 0
    %12 = vsyncpa [#allocation4], 0
    %s13 = scalar_lea.sflag [#allocation4], 1
    %14 = vsyncpa %s13, 0
    loop: start=0, step=1, limit=10
    $region2: #{tpu_custom_call.1} parent=1 // loop_pre_header
      _
    $region3: #{tpu_custom_call.1} parent=1 // loop_header
      %s16 = sphi 0, %s20
      %p17 = scmp.ge.s32.totalorder %s16, 10
      %s23 = sphi 0, %s35
      %s24 = sphi 0, %s31
      %s25 = sphi 0, %s23
      %s26 = sphi 0, %s24
      %s27 = sphi 0, %s25
      %s28 = sphi 0, %s26
      %s40 = sphi 0, %s42
      %s43 = sphi 0, %s40
      %s44 = sphi 0, %s43
      %s60 = sphi 0, %s44
      %s66 = sphi 0, %s68
      %s69 = sphi 0, %s66
      %s70 = sphi 0, %s69
      %s86 = sphi 0, %s70
      %s90 = sphi 0, %s90
      %s92 = sphi 0, %s90
      %s93 = sphi 0, %s92
      %s107 = sphi 0, %s93
      %s111 = sphi 0, %s111
      %s113 = sphi 0, %s111
      %s114 = sphi 0, %s113
      %s128 = sphi 0, %s114
      %s136 = sphi 0, %s138
      %s139 = sphi 0, %s136
      %s140 = sphi 0, %s139
      %s156 = sphi 0, %s140
    $region4: #{tpu_custom_call.1} parent=1 // loop_header_branch
      %19 = sbr.rel (%p17) target = $region8
    $region5: #{tpu_custom_call.1} parent=1 // loop_body
      %s21 = ssub.s32 %s16, 1
      %s22 = ssub.s32 %s16, 2
      %s29 = sadd.s32 1, %s24
      %p30 = scmp.ge.s32.totalorder %s29, 4
      %s31 = scalar_select %p30, 0, %s29
      %s32 = sadd.s32 1, %s23
      %s33 = scalar_select %p30, %s32, %s23
      %p34 = scmp.ge.s32.totalorder %s33, 2
      %s35 = scalar_select %p34, 0, %s33
      %s36 = ssub.s32 %s23, %s35
      %s37 = ssub.s32 %s24, %s31
      %s38 = sor.u32 %s36, %s37
      %p39 = scmp.eq.s32.totalorder %s38, 0
      %s41 = sadd.s32 %s40, 1
      %s42 = scalar_select %p39, %s40, %s41
      %p45 = pneg %p39
      %p46 = scmp.eq.s32.totalorder %s16, 7
      %p47 = por %p45, %p46
      %p48 = scmp.ne.s32.totalorder %s40, %s43
      %p49 = scmp.eq.s32.totalorder %s16, 0
      %p50 = por %p48, %p49
      %p51 = scmp.ne.s32.totalorder %s40, %s43
      %p52 = scmp.eq.s32.totalorder %s21, 7
      %p53 = por %p51, %p52
      %p54 = scmp.ne.s32.totalorder %s43, %s44
      %p55 = scmp.eq.s32.totalorder %s21, 0
      %p56 = por %p54, %p55
      %p57 = scmp.ne.s32.totalorder %s43, %s44
      %p58 = scmp.eq.s32.totalorder %s22, 7
      %p59 = por %p57, %p58
      %p61 = scmp.ne.s32.totalorder %s44, %s60
      %p62 = scmp.eq.s32.totalorder %s22, 0
      %p63 = por %p61, %p62
      %s64 = ssub.s32 %s24, %s31
      %p65 = scmp.eq.s32.totalorder %s64, 0
      %s67 = sadd.s32 %s66, 1
      %s68 = scalar_select %p65, %s66, %s67
      %p71 = pneg %p65
      %p72 = scmp.eq.s32.totalorder %s16, 7
      %p73 = por %p71, %p72
      %p74 = scmp.ne.s32.totalorder %s66, %s69
      %p75 = scmp.eq.s32.totalorder %s16, 0
      %p76 = por %p74, %p75
      %p77 = scmp.ne.s32.totalorder %s66, %s69
      %p78 = scmp.eq.s32.totalorder %s21, 7
      %p79 = por %p77, %p78
      %p80 = scmp.ne.s32.totalorder %s69, %s70
      %p81 = scmp.eq.s32.totalorder %s21, 0
      %p82 = por %p80, %p81
      %p83 = scmp.ne.s32.totalorder %s69, %s70
      %p84 = scmp.eq.s32.totalorder %s22, 7
      %p85 = por %p83, %p84
      %p87 = scmp.ne.s32.totalorder %s70, %s86
      %p88 = scmp.eq.s32.totalorder %s22, 0
      %p89 = por %p87, %p88
      %s91 = sadd.s32 %s90, 1
      %p94 = scmp.eq.s32.totalorder %s16, 7
      %p95 = scmp.ne.s32.totalorder %s90, %s92
      %p96 = scmp.eq.s32.totalorder %s16, 0
      %p97 = por %p95, %p96
      %p98 = scmp.ne.s32.totalorder %s90, %s92
      %p99 = scmp.eq.s32.totalorder %s21, 7
      %p100 = por %p98, %p99
      %p101 = scmp.ne.s32.totalorder %s92, %s93
      %p102 = scmp.eq.s32.totalorder %s21, 0
      %p103 = por %p101, %p102
      %p104 = scmp.ne.s32.totalorder %s92, %s93
      %p105 = scmp.eq.s32.totalorder %s22, 7
      %p106 = por %p104, %p105
      %p108 = scmp.ne.s32.totalorder %s93, %s107
      %p109 = scmp.eq.s32.totalorder %s22, 0
      %p110 = por %p108, %p109
      %s112 = sadd.s32 %s111, 1
      %p115 = scmp.eq.s32.totalorder %s16, 7
      %p116 = scmp.ne.s32.totalorder %s111, %s113
      %p117 = scmp.eq.s32.totalorder %s16, 0
      %p118 = por %p116, %p117
      %p119 = scmp.ne.s32.totalorder %s111, %s113
      %p120 = scmp.eq.s32.totalorder %s21, 7
      %p121 = por %p119, %p120
      %p122 = scmp.ne.s32.totalorder %s113, %s114
      %p123 = scmp.eq.s32.totalorder %s21, 0
      %p124 = por %p122, %p123
      %p125 = scmp.ne.s32.totalorder %s113, %s114
      %p126 = scmp.eq.s32.totalorder %s22, 7
      %p127 = por %p125, %p126
      %p129 = scmp.ne.s32.totalorder %s114, %s128
      %p130 = scmp.eq.s32.totalorder %s22, 0
      %p131 = por %p129, %p130
      %s132 = ssub.s32 %s23, %s35
      %s133 = ssub.s32 %s24, %s31
      %s134 = sor.u32 %s132, %s133
      %p135 = scmp.eq.s32.totalorder %s134, 0
      %s137 = sadd.s32 %s136, 1
      %s138 = scalar_select %p135, %s136, %s137
      %p141 = pneg %p135
      %p142 = scmp.eq.s32.totalorder %s16, 7
      %p143 = por %p141, %p142
      %p144 = scmp.ne.s32.totalorder %s136, %s139
      %p145 = scmp.eq.s32.totalorder %s16, 0
      %p146 = por %p144, %p145
      %p147 = scmp.ne.s32.totalorder %s136, %s139
      %p148 = scmp.eq.s32.totalorder %s21, 7
      %p149 = por %p147, %p148
      %p150 = scmp.ne.s32.totalorder %s139, %s140
      %p151 = scmp.eq.s32.totalorder %s21, 0
      %p152 = por %p150, %p151
      %p153 = scmp.ne.s32.totalorder %s139, %s140
      %p154 = scmp.eq.s32.totalorder %s22, 7
      %p155 = por %p153, %p154
      %p157 = scmp.ne.s32.totalorder %s140, %s156
      %p158 = scmp.eq.s32.totalorder %s22, 0
      %p159 = por %p157, %p158
      %p160 = scmp.le.s32.totalorder 1, %s16
      %p161 = scmp.lt.s32.totalorder %s16, 9
      %p162 = pnand %p160, %p161
      %p163 = pneg %p162
      // Predicated region
      $region9: #{tpu_custom_call.1} parent=5 // pred_check
        _
      $region10: #{tpu_custom_call.1} parent=5 // pred_check_branch
        %165 = sbr.rel (%p162) target = $region12
      $region11: #{tpu_custom_call.1} parent=5 // pred_region
        %s166 = ssub.s32 %s16, 1
        // Predicated region
        $region13: #{tpu_custom_call.1} parent=11 // pred_check
          %p167 = pneg %p103
        $region14: #{tpu_custom_call.1} parent=11 // pred_check_branch
          %169 = sbr.rel (%p167) target = $region16
        $region15: #{tpu_custom_call.1} parent=11 // pred_region
          _
        $region16: #{tpu_custom_call.1} parent=11 // pred_fallthru
          _
        // Predicated region
        $region17: #{tpu_custom_call.1} parent=11 // pred_check
          %p170 = pneg %p124
        $region18: #{tpu_custom_call.1} parent=11 // pred_check_branch
          %172 = sbr.rel (%p170) target = $region20
        $region19: #{tpu_custom_call.1} parent=11 // pred_region
          _
        $region20: #{tpu_custom_call.1} parent=11 // pred_fallthru
          _
      $region12: #{tpu_custom_call.1} parent=5 // pred_fallthru
        _
      %p173 = scmp.lt.s32.totalorder %s16, 8
      // Predicated region
      $region21: #{tpu_custom_call.1} parent=5 // pred_check
        %p174 = pneg %p173
      $region22: #{tpu_custom_call.1} parent=5 // pred_check_branch
        %176 = sbr.rel (%p174) target = $region24
      $region23: #{tpu_custom_call.1} parent=5 // pred_region
        // Predicated region
        $region25: #{tpu_custom_call.1} parent=23 // pred_check
          %p177 = pneg %p50
        $region26: #{tpu_custom_call.1} parent=23 // pred_check_branch
          %179 = sbr.rel (%p177) target = $region28
        $region27: #{tpu_custom_call.1} parent=23 // pred_region
          %s180 = sand.u32 %s40, 1
          %s181 = scalar_lea.sflag [#allocation3], %s180
          %s182 = sand.u32 %s40, 1
          %s183 = smul.addr %s182, 32
          %s184 = scalar_lea.vmem [#allocation2], %s183
          %s185 = smul.u32 2, %s24
          %s187 = ssub.s32 512, 512
          %188 = vsyncadd %s181, %s187
          %s189 = smul.addr %s185, 2
          %s190 = smul.addr %s23, 16
          %s191 = sadd.s32 %s189, %s190
          %s192 = smul.addr %s191, 128
          %s193 = scalar_lea.hbm %s0, %s192
          %s194 = sshll.u32 %s184, 4
          %s195 = int_to_ptr.vmem [resolvable:$true] %s194
          %200 = dma.hbm_to_vmem [thread:$0]  %s193, 512, %s195, %s181, 256, 256, 16
        $region28: #{tpu_custom_call.1} parent=23 // pred_fallthru
          _
        // Predicated region
        $region29: #{tpu_custom_call.1} parent=23 // pred_check
          %p201 = pneg %p76
        $region30: #{tpu_custom_call.1} parent=23 // pred_check_branch
          %203 = sbr.rel (%p201) target = $region32
        $region31: #{tpu_custom_call.1} parent=23 // pred_region
          %s204 = smul.u32 2, %s24
          %p205 = scmp.lt.s32.totalorder %s204, 7
          %s206 = scalar_select %p205, %s204, 7
          %s207 = smul.addr %s206, 8
          %s208 = scalar_lea.vmem %s1, %s207
          %s209 = smul.u32 2, %s24
        $region32: #{tpu_custom_call.1} parent=23 // pred_fallthru
          _
      $region24: #{tpu_custom_call.1} parent=5 // pred_fallthru
        _
      %p210 = scmp.le.s32.totalorder 1, %s16
      %p211 = scmp.lt.s32.totalorder %s16, 9
      %p212 = pnand %p210, %p211
      %p213 = pneg %p212
      // Predicated region
      $region33: #{tpu_custom_call.1} parent=5 // pred_check
        _
      $region34: #{tpu_custom_call.1} parent=5 // pred_check_branch
        %215 = sbr.rel (%p212) target = $region36
      $region35: #{tpu_custom_call.1} parent=5 // pred_region
        %s216 = ssub.s32 %s16, 1
        %s217 = sand.u32 %s43, 1
        %s218 = scalar_lea.sflag [#allocation3], %s217
        %s219 = sand.u32 %s43, 1
        %s220 = smul.addr %s219, 32
        %s221 = scalar_lea.vmem [#allocation2], %s220
        // Predicated region
        $region37: #{tpu_custom_call.1} parent=35 // pred_check
          %p222 = pneg %p56
        $region38: #{tpu_custom_call.1} parent=35 // pred_check_branch
          %224 = sbr.rel (%p222) target = $region40
        $region39: #{tpu_custom_call.1} parent=35 // pred_region
          %225 = dma.done %s218, 512
        $region40: #{tpu_custom_call.1} parent=35 // pred_fallthru
          _
        %s226 = sand.u32 %s43, 1
        %s227 = scalar_lea.sflag [#allocation3], %s226
        %s228 = sand.u32 %s43, 1
        %s229 = smul.addr %s228, 32
        %s230 = scalar_lea.vmem [#allocation2], %s229
        %p231 = pneg %p56
        %p232 = pneg %p53
        %s233 = smul.u32 2, %s26
        %p234 = scmp.lt.s32.totalorder %s233, 7
        %s235 = scalar_select %p234, %s233, 7
        %s236 = smul.addr %s235, 8
        %s237 = scalar_lea.vmem %s1, %s236
        %p238 = pneg %p82
        %p239 = pneg %p79
        %p240 = pneg %p103
        %p241 = pneg %p100
        %p242 = pneg %p124
        %p243 = pneg %p121
        %p244 = pneg %p152
        %p245 = pneg %p149
        %s246 = sand.u32 %s139, 1
        %s247 = scalar_lea.sflag [#allocation4], %s246
        %s248 = sand.u32 %s139, 1
        %s249 = smul.addr %s248, 32
        %s250 = scalar_lea.vmem [#allocation5], %s249
        %s251 = smul.u32 2, %s26
        %s252 = smul.u32 2, %s26
        %p253 = scmp.lt.s32.totalorder %s252, 7
        %s254 = scalar_select %p253, %s252, 7
        %s255 = smul.addr %s254, 8
        %s256 = scalar_lea.vmem %s1, %s255
        %s257 = smul.u32 2, %s26
        %s258 = smul.u32 2, %s26
        %v259 = vld [vmem:[%s221] sm:$0xff]
        %v260 = vld [vmem:[%s221 + $0x8] sm:$0xff]
        %v261 = vld [vmem:[%s221 + $0x10] sm:$0xff]
        %v262 = vld [vmem:[%s221 + $0x18] sm:$0xff]
        %v263 = vadd.f32 %v259, %v260
        %264 = vadd.xlane.f32.xlu0 %v263
        %v265 = vpop.xlane.xlu0 %264
        %v266 = vadd.f32 %v261, %v262
        %267 = vadd.xlane.f32.xlu0 %v266
        %v268 = vpop.xlane.xlu0 %267
        %v269 = vmul.f32 %v259, %v259
        %v270 = vmul.f32 %v260, %v260
        %v271 = vmul.f32 %v261, %v261
        %v272 = vmul.f32 %v262, %v262
        %v273 = vadd.f32 %v269, %v270
        %274 = vadd.xlane.f32.xlu0 %v273
        %v275 = vpop.xlane.xlu0 %274
        %v276 = vadd.f32 %v271, %v272
        %277 = vadd.xlane.f32.xlu0 %v276
        %v278 = vpop.xlane.xlu0 %277
        %vm279 = vcmask 7168
        %v280 = vsel %vm279, %v265, %v275
        %v281 = vsel %vm279, %v268, %v278
        %v282 = vld [vmem:[%s2] sm:$0xff]
        %vm283 = vcmask 130048
        %v285 = vsel %vm283, %v282, 0
        %287 = vmatprep.subr.mxu0 0.0
        %288 = vmatpush1.msra.mxu0 %v280
        %289 = vmatprep.subr.mxu0 0.0
        %290 = vmatpush1.msra.mxu0 %v281
        %291 = vmatprep.subr.mxu0 0.0
        %292 = vmatpush1.msra.mxu0 0.0
        %293 = vmatprep.subr.mxu0 0.0
        %294 = vmatpush1.msra.mxu0 0.0
        %295 = vmatprep.subr.mxu0 0.0
        %296 = vmatpush1.msra.mxu0 0.0
        %297 = vmatprep.subr.mxu0 0.0
        %298 = vmatpush1.msra.mxu0 0.0
        %299 = vmatprep.subr.mxu0 0.0
        %300 = vmatpush1.msra.mxu0 0.0
        %301 = vmatprep.subr.mxu0 0.0
        %302 = vmatpush1.msra.mxu0 0.0
        %303 = vmatprep.subr.mxu0 0.0
        %304 = vmatpush1.msra.mxu0 0.0
        %305 = vmatprep.subr.mxu0 0.0
        %306 = vmatpush1.msra.mxu0 0.0
        %307 = vmatprep.subr.mxu0 0.0
        %308 = vmatpush1.msra.mxu0 0.0
        %309 = vmatprep.subr.mxu0 0.0
        %310 = vmatpush1.msra.mxu0 0.0
        %311 = vmatprep.subr.mxu0 0.0
        %312 = vmatpush1.msra.mxu0 0.0
        %313 = vmatprep.subr.mxu0 0.0
        %314 = vmatpush1.msra.mxu0 0.0
        %315 = vmatprep.subr.mxu0 0.0
        %316 = vmatpush1.msra.mxu0 0.0
        %317 = vmatprep.subr.mxu0 0.0
        %318 = vmatpush1.msra.mxu0 0.0
        %319 = vmatprep.subr.mxu0 0.0
        %320 = vmatpush1.msra.mxu0 0.0
        %321 = vmatprep.subr.mxu0 0.0
        %322 = vmatpush1.msra.mxu0 0.0
        %323 = vmatprep.subr.mxu0 0.0
        %324 = vmatpush1.msra.mxu0 0.0
        %325 = vmatprep.subr.mxu0 0.0
        %326 = vmatpush1.msra.mxu0 0.0
        %327 = vmatprep.subr.mxu0 0.0
        %328 = vmatpush1.msra.mxu0 0.0
        %329 = vmatprep.subr.mxu0 0.0
        %330 = vmatpush1.msra.mxu0 0.0
        %331 = vmatprep.subr.mxu0 0.0
        %332 = vmatpush1.msra.mxu0 0.0
        %333 = vmatprep.subr.mxu0 0.0
        %334 = vmatpush1.msra.mxu0 0.0
        %335 = vmatprep.subr.mxu0 0.0
        %336 = vmatpush1.msra.mxu0 0.0
        %337 = vmatprep.subr.mxu0 0.0
        %338 = vmatpush1.msra.mxu0 0.0
        %339 = vmatprep.subr.mxu0 0.0
        %340 = vmatpush1.msra.mxu0 0.0
        %341 = vmatprep.subr.mxu0 0.0
        %342 = vmatpush1.msra.mxu0 0.0
        %343 = vmatprep.subr.mxu0 0.0
        %344 = vmatpush1.msra.mxu0 0.0
        %345 = vmatprep.subr.mxu0 0.0
        %346 = vmatpush1.msra.mxu0 0.0
        %347 = vmatprep.subr.mxu0 0.0
        %348 = vmatpush1.msra.mxu0 0.0
        %349 = vmatprep.subr.mxu0 0.0
        %350 = vmatpush1.msra.mxu0 0.0
        %351 = vmatprep.mubr.f32.mxu0 0.0
        %352 = vmatmul.mubr.f32.gmra.mrb[0].mxu0 %v285
        %v353 = vpop.f32.mrb[0].mxu0
        %v354 = vadd.f32 0.0, %v353
        %v355 = vpop.f32.mrb[0].mxu0
        %356 = vdwg.mxu0
        %v357 = vmul.f32 %v354, 0.001953125
        %v358 = vmul.f32 %v357, %v357
        %360 = vrot.lane.b32.xlu0 %v358, 1
        %v361 = vpop.permute.xlu0 %360
        %v363 = vsub.f32 %v357, %v361
        %v364 = vmax.f32 %v363, 0.0
        %v365 = vadd.f32 %v364, 1e-06
        %v366 = vrsqrt.pop %v365
        %v367 = vld [vmem:[%s3] sm:$0xff]
        %v368 = vld [vmem:[%s3 + $0x8] sm:$0xff]
        %370 = vrot.lane.b32.xlu0 %v366, 127
        %v371 = vpop.permute.xlu0 %370
        %vm373 = vcmask 64512
        %v375 = vsel %vm373, %v367, 0
        %v378 = vsel %vm373, %v368, 0
        %380 = vmatprep.subr.mxu0 0.0
        %381 = vmatpush1.msra.mxu0 %v371
        %382 = vmatprep.subr.mxu0 0.0
        %383 = vmatpush1.msra.mxu0 0.0
        %384 = vmatprep.subr.mxu0 0.0
        %385 = vmatpush1.msra.mxu0 0.0
        %386 = vmatprep.subr.mxu0 0.0
        %387 = vmatpush1.msra.mxu0 0.0
        %388 = vmatprep.subr.mxu0 0.0
        %389 = vmatpush1.msra.mxu0 0.0
        %390 = vmatprep.subr.mxu0 0.0
        %391 = vmatpush1.msra.mxu0 0.0
        %392 = vmatprep.subr.mxu0 0.0
        %393 = vmatpush1.msra.mxu0 0.0
        %394 = vmatprep.subr.mxu0 0.0
        %395 = vmatpush1.msra.mxu0 0.0
        %396 = vmatprep.subr.mxu0 0.0
        %397 = vmatpush1.msra.mxu0 0.0
        %398 = vmatprep.subr.mxu0 0.0
        %399 = vmatpush1.msra.mxu0 0.0
        %400 = vmatprep.subr.mxu0 0.0
        %401 = vmatpush1.msra.mxu0 0.0
        %402 = vmatprep.subr.mxu0 0.0
        %403 = vmatpush1.msra.mxu0 0.0
        %404 = vmatprep.subr.mxu0 0.0
        %405 = vmatpush1.msra.mxu0 0.0
        %406 = vmatprep.subr.mxu0 0.0
        %407 = vmatpush1.msra.mxu0 0.0
        %408 = vmatprep.subr.mxu0 0.0
        %409 = vmatpush1.msra.mxu0 0.0
        %410 = vmatprep.subr.mxu0 0.0
        %411 = vmatpush1.msra.mxu0 0.0
        %412 = vmatprep.subr.mxu0 0.0
        %413 = vmatpush1.msra.mxu0 0.0
        %414 = vmatprep.subr.mxu0 0.0
        %415 = vmatpush1.msra.mxu0 0.0
        %416 = vmatprep.subr.mxu0 0.0
        %417 = vmatpush1.msra.mxu0 0.0
        %418 = vmatprep.subr.mxu0 0.0
        %419 = vmatpush1.msra.mxu0 0.0
        %420 = vmatprep.subr.mxu0 0.0
        %421 = vmatpush1.msra.mxu0 0.0
        %422 = vmatprep.subr.mxu0 0.0
        %423 = vmatpush1.msra.mxu0 0.0
        %424 = vmatprep.subr.mxu0 0.0
        %425 = vmatpush1.msra.mxu0 0.0
        %426 = vmatprep.subr.mxu0 0.0
        %427 = vmatpush1.msra.mxu0 0.0
        %428 = vmatprep.subr.mxu0 0.0
        %429 = vmatpush1.msra.mxu0 0.0
        %430 = vmatprep.subr.mxu0 0.0
        %431 = vmatpush1.msra.mxu0 0.0
        %432 = vmatprep.subr.mxu0 0.0
        %433 = vmatpush1.msra.mxu0 0.0
        %434 = vmatprep.subr.mxu0 0.0
        %435 = vmatpush1.msra.mxu0 0.0
        %436 = vmatprep.subr.mxu0 0.0
        %437 = vmatpush1.msra.mxu0 0.0
        %438 = vmatprep.subr.mxu0 0.0
        %439 = vmatpush1.msra.mxu0 0.0
        %440 = vmatprep.subr.mxu0 0.0
        %441 = vmatpush1.msra.mxu0 0.0
        %442 = vmatprep.subr.mxu0 0.0
        %443 = vmatpush1.msra.mxu0 0.0
        %444 = vmatprep.mubr.f32.mxu0 0.0
        %445 = vmatmul.mubr.f32.gmra.mrb[0].mxu0 %v375
        %v446 = vpop.f32.mrb[0].mxu0
        %v447 = vadd.f32 0.0, %v446
        %v448 = vpop.f32.mrb[0].mxu0
        %449 = vmatprep.mubr.f32.mxu0 0.0
        %450 = vmatmul.mubr.f32.gmra.mrb[0].mxu0 %v378
        %v451 = vpop.f32.mrb[0].mxu0
        %v452 = vadd.f32 0.0, %v451
        %v453 = vpop.f32.mrb[0].mxu0
        %454 = vdwg.mxu0
        %v455 = vld [vmem:[%s256] sm:$0xff]
        %v456 = vld [vmem:[%s256 + $0x8] sm:$0xff]
        %v457 = vmul.f32 %v447, %v455
        %v458 = vmul.f32 %v452, %v456
        %460 = vset.pattern.permute.xlu0 0
        %461 = vperm.xlu0 %460, %v457
        %v462 = vpop.permute.xlu0 %461
        %465 = vset.pattern.permute.xlu0 0
        %466 = vperm.xlu0 %465, %v458
        %v467 = vpop.permute.xlu0 %466
        %v469 = vmul.f32 %v259, %v462
        %v470 = vmul.f32 %v260, %v462
        %v471 = vmul.f32 %v261, %v467
        %v472 = vmul.f32 %v262, %v467
        %473 = vst [vmem:[%s250] sm:$0xff] %v469
        %474 = vst [vmem:[%s250 + $0x8] sm:$0xff] %v470
        %475 = vst [vmem:[%s250 + $0x10] sm:$0xff] %v471
        %476 = vst [vmem:[%s250 + $0x18] sm:$0xff] %v472
        %s477 = sand.u32 %s139, 1
        %s478 = scalar_lea.sflag [#allocation4], %s477
        %s479 = sand.u32 %s139, 1
        %s480 = smul.addr %s479, 32
        %s481 = scalar_lea.vmem [#allocation5], %s480
        // Predicated region
        $region41: #{tpu_custom_call.1} parent=35 // pred_check
          %p482 = pneg %p149
        $region42: #{tpu_custom_call.1} parent=35 // pred_check_branch
          %484 = sbr.rel (%p482) target = $region44
        $region43: #{tpu_custom_call.1} parent=35 // pred_region
          %s485 = smul.u32 2, %s26
          %s487 = ssub.s32 512, 512
          %488 = vsyncadd %s478, %s487
          %s489 = smul.addr %s485, 2
          %s490 = smul.addr %s25, 16
          %s491 = sadd.s32 %s489, %s490
          %s492 = smul.addr %s491, 128
          %s493 = scalar_lea.hbm %s4, %s492
          %s494 = sshll.u32 %s481, 4
          %s495 = int_to_ptr.vmem [resolvable:$true] %s494
          %500 = dma.vmem_to_hbm [thread:$0]  %s495, 512, %s493, %s478, 256, 256, 16
        $region44: #{tpu_custom_call.1} parent=35 // pred_fallthru
          _
      $region36: #{tpu_custom_call.1} parent=5 // pred_fallthru
        _
      %p501 = scmp.le.s32.totalorder 2, %s16
      // Predicated region
      $region45: #{tpu_custom_call.1} parent=5 // pred_check
        %p502 = pneg %p501
      $region46: #{tpu_custom_call.1} parent=5 // pred_check_branch
        %504 = sbr.rel (%p502) target = $region48
      $region47: #{tpu_custom_call.1} parent=5 // pred_region
        %s505 = ssub.s32 %s16, 2
        // Predicated region
        $region49: #{tpu_custom_call.1} parent=47 // pred_check
          %p506 = pneg %p155
        $region50: #{tpu_custom_call.1} parent=47 // pred_check_branch
          %508 = sbr.rel (%p506) target = $region52
        $region51: #{tpu_custom_call.1} parent=47 // pred_region
          %s509 = sand.u32 %s140, 1
          %s510 = scalar_lea.sflag [#allocation4], %s509
          %s511 = sand.u32 %s140, 1
          %s512 = smul.addr %s511, 32
          %s513 = scalar_lea.vmem [#allocation5], %s512
          %514 = dma.done %s510, 512
        $region52: #{tpu_custom_call.1} parent=47 // pred_fallthru
          _
      $region48: #{tpu_custom_call.1} parent=5 // pred_fallthru
        _
    $region6: #{tpu_custom_call.1} parent=1 // loop_footer
      %s20 = sadd.s32 1, %s16
    $region7: #{tpu_custom_call.1} parent=1 // loop_footer_branch
      %15 = sbr.rel target = $region3
    $region8: #{tpu_custom_call.1} parent=1 // loop_exit
      _
    %515 = vsyncpa [#allocation3], 1
    %s516 = scalar_lea.sflag [#allocation3], 1
    %517 = vsyncpa %s516, 1
    %518 = vsyncpa [#allocation4], 1
    %s519 = scalar_lea.sflag [#allocation4], 1
    %520 = vsyncpa %s519, 1

</llo_original>
